<compile_context>
chip_gen: v6e
topology: v6e:2x2x1
jax: 0.10.0
libtpu: 0.0.40
codegen_flags: <defaults>
</compile_context>

<pallas_src>
import jax
import jax.numpy as jnp
from jax.experimental import pallas as pl
from jax.experimental.pallas import tpu as pltpu


def contact_decoder_kernel(x_ref, w1_ref, b1_ref, w2_ref, b2_ref, o_ref):
    x = x_ref[...]                                                  # (TM, Z)
    # Layer 1 on the MXU, f32 accumulate.
    h = jnp.dot(x, w1_ref[...], preferred_element_type=jnp.float32)
    h = h + b1_ref[...]                                             # (TM, 256)
    # LeakyReLU(0.1) on the VPU.
    h = jnp.where(h > 0, h, jnp.float32(0.1) * h)
    # Layer 2 (out_features=1): VPU multiply + lane reduction instead of an MXU
    # matmul with a degenerate N=1 output.
    z = jnp.sum(h * w2_ref[...], axis=-1, keepdims=True)            # (TM, 1)
    z = z + b2_ref[0]                                               # SMEM scalar
    # Sigmoid (exp lands on the EUP slot).
    o_ref[...] = jax.nn.sigmoid(z).astype(o_ref.dtype)


def _round_up(n, m):
    return ((n + m - 1) // m) * m


def contact_decoder(x, w1, b1, w2_row, b2, *, block_rows=1024):
    """Forward pass of ContactDecoder.

    x:      (B, Z)  float32
    w1:     (Z, H)  float32   (torch Linear weight transposed)
    b1:     (1, H)  float32
    w2_row: (1, H)  float32   (torch (1, 256) weight, used row-wise)
    b2:     (1,)    float32
    returns (B, 1)  float32
    """
    B, Z = x.shape
    H = w1.shape[1]
    assert w1.shape == (Z, H) and b1.shape == (1, H)
    assert w2_row.shape == (1, H) and b2.shape == (1,)

    # Batch tile: multiple of 8 sublanes, capped by block_rows.
    TM = min(block_rows, _round_up(B, 8))
    grid = (pl.cdiv(B, TM),)

    return pl.pallas_call(
        contact_decoder_kernel,
        out_shape=jax.ShapeDtypeStruct((B, 1), jnp.float32),
        grid_spec=pltpu.PrefetchScalarGridSpec(
            num_scalar_prefetch=0,
            grid=grid,
            in_specs=[
                pl.BlockSpec((TM, Z), lambda i: (i, 0)),             # x: tiled, pipelined
                pl.BlockSpec((Z, H), lambda i: (0, 0)),              # w1: VMEM-resident
                pl.BlockSpec((1, H), lambda i: (0, 0)),              # b1: VMEM-resident
                pl.BlockSpec((1, H), lambda i: (0, 0)),              # w2 row: VMEM-resident
                pl.BlockSpec(memory_space=pltpu.MemorySpace.SMEM),   # b2: SMEM scalar
            ],
            out_specs=pl.BlockSpec((TM, 1), lambda i: (i, 0)),
        ),
        compiler_params=pltpu.CompilerParams(
            dimension_semantics=("parallel",),   # shard batch tiles across TCs (v7x)
        ),
    )(x, w1, b1, w2_row, b2)


def reference(x, w1, b1, w2_row, b2):
    h = x @ w1 + b1
    h = jnp.where(h > 0, h, 0.1 * h)
    z = h @ w2_row.T + b2[None, :]
    return jax.nn.sigmoid(z)


if __name__ == "__main__":
    key = jax.random.PRNGKey(0)
    k_x, k_w1, k_b1, k_w2, k_b2, k_x2 = jax.random.split(key, 6)

    Z, H = 32, 256  # z_dim=32, hidden=256 per module definition

    # Deterministic parameter init (uniform, roughly matching torch.nn.Linear scale)
    lim1 = 1.0 / (Z ** 0.5)
    w1 = jax.random.uniform(k_w1, (Z, H), jnp.float32, -lim1, lim1)
    b1 = jax.random.uniform(k_b1, (1, H), jnp.float32, -lim1, lim1)
    lim2 = 1.0 / (H ** 0.5)
    w2_row = jax.random.uniform(k_w2, (1, H), jnp.float32, -lim2, lim2)
    b2 = jax.random.uniform(k_b2, (1,), jnp.float32, -lim2, lim2)

    # Small-batch check (single grid step).
    B = 8
    x = jax.random.normal(k_x, (B, Z), dtype=jnp.float32)
    out = jax.block_until_ready(contact_decoder(x, w1, b1, w2_row, b2))
    ref = reference(x, w1, b1, w2_row, b2)
    assert out.shape == (B, 1)
    assert jnp.allclose(out, ref, atol=1e-5, rtol=1e-5), "mismatch vs reference (B=8)"

    # Multi-tile check: exercises the grid / resident-weight index_map / pipelining.
    B2 = 4096
    x2 = jax.random.normal(k_x2, (B2, Z), dtype=jnp.float32)
    out2 = jax.block_until_ready(contact_decoder(x2, w1, b1, w2_row, b2, block_rows=1024))
    ref2 = reference(x2, w1, b1, w2_row, b2)
    assert out2.shape == (B2, 1)
    assert jnp.allclose(out2, ref2, atol=1e-5, rtol=1e-5), "mismatch vs reference (B=4096)"

    print("KERNEL_OK")
</pallas_src>

<mosaic_0001>
module attributes {stable_mosaic.version = 11 : i64} {
  func.func @contact_decoder_kernel(%arg0: i32, %arg1: memref<8x32xf32, #tpu.memory_space<vmem>>, %arg2: memref<32x256xf32, #tpu.memory_space<vmem>>, %arg3: memref<1x256xf32, #tpu.memory_space<vmem>>, %arg4: memref<1x256xf32, #tpu.memory_space<vmem>>, %arg5: memref<1xf32, #tpu.memory_space<smem>>, %arg6: memref<8x1xf32, #tpu.memory_space<vmem>>) attributes {dimension_semantics = [#tpu.dimension_semantics<parallel>], iteration_bounds = array<i64: 1>, scalar_prefetch = 0 : i64, scratch_operands = 0 : i64, tpu.core_type = #tpu.core_type<tc>, window_params = [{transform_indices = @transform_0, window_bounds = array<i64: 8, 32>}, {pipeline_mode = #tpu.pipeline_mode<synchronous>, transform_indices = @transform_1, window_bounds = array<i64: 32, 256>}, {pipeline_mode = #tpu.pipeline_mode<synchronous>, transform_indices = @transform_2, window_bounds = array<i64: 1, 256>}, {pipeline_mode = #tpu.pipeline_mode<synchronous>, transform_indices = @transform_3, window_bounds = array<i64: 1, 256>}, {transform_indices = @transform_4, window_bounds = array<i64: 1>}, {transform_indices = @transform_5, window_bounds = array<i64: 8, 1>}]} {
    %c0 = arith.constant 0 : index
    %c0_0 = arith.constant 0 : index
    %0 = vector.load %arg1[%c0, %c0_0] : memref<8x32xf32, #tpu.memory_space<vmem>>, vector<8x32xf32>
    %c0_1 = arith.constant 0 : index
    %c0_2 = arith.constant 0 : index
    %1 = vector.load %arg2[%c0_1, %c0_2] : memref<32x256xf32, #tpu.memory_space<vmem>>, vector<32x256xf32>
    %cst = arith.constant dense<0.000000e+00> : vector<8x256xf32>
    %2 = tpu.matmul %0, %1, %cst {dimension_numbers = #tpu.dot_dimension_numbers<[1], [0], [0], [1], [0, 0, 1, 1], [], []>} : vector<8x32xf32>, vector<32x256xf32>, vector<8x256xf32> -> vector<8x256xf32>
    %c0_3 = arith.constant 0 : index
    %c0_4 = arith.constant 0 : index
    %3 = vector.load %arg3[%c0_3, %c0_4] : memref<1x256xf32, #tpu.memory_space<vmem>>, vector<1x256xf32>
    %4 = vector.broadcast %3 : vector<1x256xf32> to vector<8x256xf32>
    %5 = arith.addf %2, %4 : vector<8x256xf32>
    %cst_5 = arith.constant 0.000000e+00 : f32
    %6 = vector.broadcast %cst_5 : f32 to vector<8x256xf32>
    %7 = arith.cmpf ogt, %5, %6 : vector<8x256xf32>
    %cst_6 = arith.constant 1.000000e-01 : f32
    %8 = vector.broadcast %cst_6 : f32 to vector<8x256xf32>
    %9 = arith.mulf %8, %5 : vector<8x256xf32>
    %10 = arith.select %7, %5, %9 : vector<8x256xi1>, vector<8x256xf32>
    %c0_7 = arith.constant 0 : index
    %c0_8 = arith.constant 0 : index
    %11 = vector.load %arg4[%c0_7, %c0_8] : memref<1x256xf32, #tpu.memory_space<vmem>>, vector<1x256xf32>
    %12 = vector.broadcast %11 : vector<1x256xf32> to vector<8x256xf32>
    %13 = arith.mulf %10, %12 : vector<8x256xf32>
    %cst_9 = arith.constant dense<0.000000e+00> : vector<8xf32>
    %14 = vector.multi_reduction <add>, %13, %cst_9 [1] : vector<8x256xf32> to vector<8xf32>
    %15 = vector.shape_cast %14 : vector<8xf32> to vector<8x1xf32>
    %c0_10 = arith.constant 0 : index
    %16 = memref.load %arg5[%c0_10] : memref<1xf32, #tpu.memory_space<smem>>
    %17 = vector.broadcast %16 : f32 to vector<8x1xf32>
    %18 = arith.addf %15, %17 : vector<8x1xf32>
    %19 = arith.negf %18 : vector<8x1xf32>
    %20 = math.exp %19 : vector<8x1xf32>
    %cst_11 = arith.constant 1.000000e+00 : f32
    %21 = vector.broadcast %cst_11 : f32 to vector<8x1xf32>
    %22 = arith.addf %21, %20 : vector<8x1xf32>
    %23 = arith.divf %21, %22 : vector<8x1xf32>
    %c0_12 = arith.constant 0 : index
    %c0_13 = arith.constant 0 : index
    %24 = vector.load %arg6[%c0_12, %c0_13] : memref<8x1xf32, #tpu.memory_space<vmem>>, vector<8x1xf32>
    tpu.vector_store %arg6[%c0_12, %c0_13], %23 {strides = array<i32>} : memref<8x1xf32, #tpu.memory_space<vmem>>, vector<8x1xf32>,
    return
  }
  func.func @transform_0(%arg0: i32) -> (i32, i32) {
    %c0_i32 = arith.constant 0 : i32
    %c0_i32_0 = arith.constant 0 : i32
    return %arg0, %c0_i32 : i32, i32
  }
  func.func @transform_1(%arg0: i32) -> (i32, i32) {
    %c0_i32 = arith.constant 0 : i32
    %c0_i32_0 = arith.constant 0 : i32
    %c0_i32_1 = arith.constant 0 : i32
    return %c0_i32, %c0_i32_0 : i32, i32
  }
  func.func @transform_2(%arg0: i32) -> (i32, i32) {
    %c0_i32 = arith.constant 0 : i32
    %c0_i32_0 = arith.constant 0 : i32
    %c0_i32_1 = arith.constant 0 : i32
    return %c0_i32, %c0_i32_0 : i32, i32
  }
  func.func @transform_3(%arg0: i32) -> (i32, i32) {
    %c0_i32 = arith.constant 0 : i32
    %c0_i32_0 = arith.constant 0 : i32
    %c0_i32_1 = arith.constant 0 : i32
    return %c0_i32, %c0_i32_0 : i32, i32
  }
  func.func @transform_4(%arg0: i32) -> i32 {
    %c0_i32 = arith.constant 0 : i32
    %c0_i32_0 = arith.constant 0 : i32
    return %c0_i32 : i32
  }
  func.func @transform_5(%arg0: i32) -> (i32, i32) {
    %c0_i32 = arith.constant 0 : i32
    %c0_i32_0 = arith.constant 0 : i32
    return %arg0, %c0_i32 : i32, i32
  }
}

</mosaic_0001>

<llo_original>
// kernel: tpu_custom_call.1
$region0: #{tpu_custom_call.1}
  #allocation0 [shape = 'u32[]', space=smem, size = 0x4, offset = 0x4, fixed_abs, tag = 'smem constant byte address 0x4 - core index']
  #allocation1 [shape = 'u32[144,128]{1,0:T(1,128)}', space=vmem, size = 0x12000, scoped, tag = 'internal scratch']
  #allocation2 [shape = 'f32[1]{0:T(128)S(6)}', space=smem, size = 0x200, scoped, tag = 'scoped memory for tpu_custom_call.1']
  %s0 = inlined_call_operand.hbm [shape: f32[8,32], index: 0, kind: input, shape index: {}]
  %s1 = inlined_call_operand.hbm [shape: f32[32,256], index: 1, kind: input, shape index: {}]
  %s2 = inlined_call_operand.vmem [shape: f32[1,256], index: 2, kind: input, shape index: {}]
  %s3 = inlined_call_operand.vmem [shape: f32[1,256], index: 3, kind: input, shape index: {}]
  %s4 = inlined_call_operand.<no memory space> [shape: f32[1], index: 4, kind: input, shape index: {}]
  %s5 = inlined_call_operand.vmem [shape: f32[8,1], index: 5, kind: output, shape index: {}]
  %s6 = sld [smem:[#allocation0]]
  $region38: #{tpu_custom_call.1} parent=0
    _
  %s8 = ssub.s32 1, %s6
  %s9 = scalar_select 0, %s8, %s6
  %10 = sst [smem:[#allocation2]] %s4
  $region1: #{tpu_custom_call.1} parent=0
    #allocation3 [shape = 'u8[4096]{0}', space=vmem, size = 0x1000, scoped, tag = 'input window, operand 0, single buffered']
    #allocation4 [shape = 's32[1]{0}', space=sflag, size = 0x4, scoped, tag = 'scoped memory for tpu_custom_call.1']
    #allocation5 [shape = 'u8[32768]{0}', space=vmem, size = 0x8000, scoped, tag = 'input window, operand 1, single buffered']
    #allocation6 [shape = 's32[1]{0}', space=sflag, size = 0x4, scoped, tag = 'scoped memory for tpu_custom_call.1']
    %11 = vsyncpa [#allocation4], 0
    %12 = vsyncpa [#allocation6], 0
    // Predicated region
    $region2: #{tpu_custom_call.1} parent=1 // pred_check
      _
    $region3: #{tpu_custom_call.1} parent=1 // pred_check_branch
      %14 = sbr.rel (0) target = $region5
    $region4: #{tpu_custom_call.1} parent=1 // pred_region
      %s16 = ssub.s32 128, 128
      %17 = vsyncadd [#allocation4], %s16
      %s19 = sshll.u32 [#allocation3], 4
      %s20 = int_to_ptr.vmem [resolvable:$true] %s19
      %22 = dma.hbm_to_vmem [thread:$0]  %s0, 128, %s20, [#allocation4]
    $region5: #{tpu_custom_call.1} parent=1 // pred_fallthru
      _
    // Predicated region
    $region6: #{tpu_custom_call.1} parent=1 // pred_check
      _
    $region7: #{tpu_custom_call.1} parent=1 // pred_check_branch
      %24 = sbr.rel (0) target = $region9
    $region8: #{tpu_custom_call.1} parent=1 // pred_region
      %s26 = ssub.s32 1024, 1024
      %27 = vsyncadd [#allocation6], %s26
      %s28 = sshll.u32 [#allocation5], 4
      %s29 = int_to_ptr.vmem [resolvable:$true] %s28
      %34 = dma.hbm_to_vmem [thread:$0]  %s1, 1024, %s29, [#allocation6], 256, 256, 16
    $region9: #{tpu_custom_call.1} parent=1 // pred_fallthru
      _
    // Predicated region
    $region10: #{tpu_custom_call.1} parent=1 // pred_check
      _
    $region11: #{tpu_custom_call.1} parent=1 // pred_check_branch
      %36 = sbr.rel (0) target = $region13
    $region12: #{tpu_custom_call.1} parent=1 // pred_region
      _
    $region13: #{tpu_custom_call.1} parent=1 // pred_fallthru
      _
    // Predicated region
    $region14: #{tpu_custom_call.1} parent=1 // pred_check
      _
    $region15: #{tpu_custom_call.1} parent=1 // pred_check_branch
      %38 = sbr.rel (0) target = $region17
    $region16: #{tpu_custom_call.1} parent=1 // pred_region
      _
    $region17: #{tpu_custom_call.1} parent=1 // pred_fallthru
      _
    // Predicated region
    $region18: #{tpu_custom_call.1} parent=1 // pred_check
      _
    $region19: #{tpu_custom_call.1} parent=1 // pred_check_branch
      %40 = sbr.rel (0) target = $region21
    $region20: #{tpu_custom_call.1} parent=1 // pred_region
      _
    $region21: #{tpu_custom_call.1} parent=1 // pred_fallthru
      _
    // Predicated region
    $region22: #{tpu_custom_call.1} parent=1 // pred_check
      _
    $region23: #{tpu_custom_call.1} parent=1 // pred_check_branch
      %42 = sbr.rel (0) target = $region25
    $region24: #{tpu_custom_call.1} parent=1 // pred_region
      %43 = dma.done [#allocation4], 128
    $region25: #{tpu_custom_call.1} parent=1 // pred_fallthru
      _
    // Predicated region
    $region26: #{tpu_custom_call.1} parent=1 // pred_check
      _
    $region27: #{tpu_custom_call.1} parent=1 // pred_check_branch
      %45 = sbr.rel (0) target = $region29
    $region28: #{tpu_custom_call.1} parent=1 // pred_region
      %46 = dma.done [#allocation6], 1024
    $region29: #{tpu_custom_call.1} parent=1 // pred_fallthru
      _
    %v47 = vld [vmem:[#allocation3] sm:$0xff]
    %v48 = vld [vmem:[#allocation5] sm:$0xff]
    %v49 = vld [vmem:[#allocation5 + $0x8] sm:$0xff]
    %v50 = vld [vmem:[#allocation5 + $0x10] sm:$0xff]
    %v51 = vld [vmem:[#allocation5 + $0x18] sm:$0xff]
    %v52 = vld [vmem:[#allocation5 + $0x20] sm:$0xff]
    %v53 = vld [vmem:[#allocation5 + $0x28] sm:$0xff]
    %v54 = vld [vmem:[#allocation5 + $0x30] sm:$0xff]
    %v55 = vld [vmem:[#allocation5 + $0x38] sm:$0xff]
    %v56 = vld [vmem:[%s2] sm:$0x3]
    %v58 = vlaneseq
    %v59 = vshrl.u32 %v58, 7
    %v60 = vsub.s32 0, %v59
    %v61 = vrot.slane %v56, %v60
    %v62 = vlaneseq
    %v63 = vshrl.u32 %v62, 7
    %v64 = vsub.s32 1, %v63
    %v65 = vrot.slane %v56, %v64
    %vm68 = vcmask 261120
    %v70 = vsel %vm68, %v47, 0
    %72 = vmatprep.subr.mxu0 0.0
    %73 = vmatpush1.msra.mxu0 0.0
    %74 = vmatprep.subr.mxu0 0.0
    %75 = vmatpush1.msra.mxu0 0.0
    %76 = vmatprep.subr.mxu0 0.0
    %77 = vmatpush1.msra.mxu0 0.0
    %78 = vmatprep.subr.mxu0 0.0
    %79 = vmatpush1.msra.mxu0 0.0
    %80 = vmatprep.subr.mxu0 0.0
    %81 = vmatpush1.msra.mxu0 0.0
    %82 = vmatprep.subr.mxu0 0.0
    %83 = vmatpush1.msra.mxu0 0.0
    %84 = vmatprep.subr.mxu0 0.0
    %85 = vmatpush1.msra.mxu0 0.0
    %86 = vmatprep.subr.mxu0 0.0
    %87 = vmatpush1.msra.mxu0 0.0
    %88 = vmatprep.subr.mxu0 0.0
    %89 = vmatpush1.msra.mxu0 0.0
    %90 = vmatprep.subr.mxu0 0.0
    %91 = vmatpush1.msra.mxu0 0.0
    %92 = vmatprep.subr.mxu0 0.0
    %93 = vmatpush1.msra.mxu0 0.0
    %94 = vmatprep.subr.mxu0 0.0
    %95 = vmatpush1.msra.mxu0 0.0
    %96 = vmatprep.subr.mxu0 %v55
    %97 = vmatpush1.msra.mxu0 %v54
    %98 = vmatprep.subr.mxu0 %v53
    %99 = vmatpush1.msra.mxu0 %v52
    %100 = vmatprep.subr.mxu0 %v51
    %101 = vmatpush1.msra.mxu0 %v50
    %102 = vmatprep.subr.mxu0 %v49
    %103 = vmatpush1.msra.mxu0 %v48
    %104 = vmatprep.subr.mxu0 0.0
    %105 = vmatpush2.msra.mxu0 0.0
    %106 = vmatprep.subr.mxu0 0.0
    %107 = vmatpush2.msra.mxu0 0.0
    %108 = vmatprep.subr.mxu0 0.0
    %109 = vmatpush2.msra.mxu0 0.0
    %110 = vmatprep.subr.mxu0 0.0
    %111 = vmatpush2.msra.mxu0 0.0
    %112 = vmatprep.subr.mxu0 0.0
    %113 = vmatpush2.msra.mxu0 0.0
    %114 = vmatprep.subr.mxu0 0.0
    %115 = vmatpush2.msra.mxu0 0.0
    %116 = vmatprep.subr.mxu0 0.0
    %117 = vmatpush2.msra.mxu0 0.0
    %118 = vmatprep.subr.mxu0 0.0
    %119 = vmatpush2.msra.mxu0 0.0
    %120 = vmatprep.subr.mxu0 0.0
    %121 = vmatpush2.msra.mxu0 0.0
    %122 = vmatprep.subr.mxu0 0.0
    %123 = vmatpush2.msra.mxu0 0.0
    %124 = vmatprep.subr.mxu0 0.0
    %125 = vmatpush2.msra.mxu0 0.0
    %126 = vmatprep.subr.mxu0 0.0
    %127 = vmatpush2.msra.mxu0 0.0
    %128 = vmatprep.subr.mxu0 0.0
    %129 = vmatpush2.msra.mxu0 0.0
    %130 = vmatprep.subr.mxu0 0.0
    %131 = vmatpush2.msra.mxu0 0.0
    %132 = vmatprep.subr.mxu0 0.0
    %133 = vmatpush2.msra.mxu0 0.0
    %134 = vmatprep.subr.mxu0 0.0
    %135 = vmatpush2.msra.mxu0 0.0
    %136 = vmatprep.mubr.f32.mxu0 0.0
    %137 = vmatmul.mubr.f32.gmra.mxu0 %v70
    %v138 = vpop.f32.mrf.mxu0
    %v139 = vadd.f32 %v61, %v138
    %v140 = vpop.f32.mrf.mxu0
    %v141 = vadd.f32 %v65, %v140
    %142 = vdwg.mxu0
    %vm143 = vcmp.gt.f32.partialorder %v139, 0.0
    %vm144 = vcmp.gt.f32.partialorder %v141, 0.0
    %v145 = vmul.f32 %v139, 0.1
    %v146 = vmul.f32 %v141, 0.1
    %v147 = vsel %vm143, %v139, %v145
    %v148 = vsel %vm144, %v141, %v146
    %v149 = vld [vmem:[%s3] sm:$0x3]
    %v151 = vlaneseq
    %v152 = vshrl.u32 %v151, 7
    %v153 = vsub.s32 0, %v152
    %v154 = vrot.slane %v149, %v153
    %v155 = vlaneseq
    %v156 = vshrl.u32 %v155, 7
    %v157 = vsub.s32 1, %v156
    %v158 = vrot.slane %v149, %v157
    %v161 = vmul.f32 %v147, %v154
    %v162 = vmul.f32 %v148, %v158
    %v163 = vadd.f32 %v161, %v162
    %164 = vadd.xlane.f32.xlu0 %v163
    %v165 = vpop.xlane.xlu0 %164
    %s166 = sld [smem:[#allocation2]]
    %v167 = vstv %s166
    %v168 = vadd.f32 %v165, %v167
    %v169 = vxor.u32 %v168, 2147483648
    %v170 = vmul.f32 %v169, 1.442695
    %v171 = vpow.pop %v170
    %v172 = vadd.f32 %v171, 1.0
    %v173 = vrcp.pop %v172
    %v174 = vmul.f32 1.0, %v173
    %vm175 = vcmask 7168
    %176 = vst.msk [vmem:[%s5] sm:$0xff] %vm175, %v174
    // Predicated region
    $region30: #{tpu_custom_call.1} parent=1 // pred_check
      _
    $region31: #{tpu_custom_call.1} parent=1 // pred_check_branch
      %178 = sbr.rel (0) target = $region33
    $region32: #{tpu_custom_call.1} parent=1 // pred_region
      _
    $region33: #{tpu_custom_call.1} parent=1 // pred_fallthru
      _
    // Predicated region
    $region34: #{tpu_custom_call.1} parent=1 // pred_check
      _
    $region35: #{tpu_custom_call.1} parent=1 // pred_check_branch
      %180 = sbr.rel (0) target = $region37
    $region36: #{tpu_custom_call.1} parent=1 // pred_region
      _
    $region37: #{tpu_custom_call.1} parent=1 // pred_fallthru
      _
    %181 = vsyncpa [#allocation4], 1
    %182 = vsyncpa [#allocation6], 1

</llo_original>
